<compile_context>
chip_gen: v7x
topology: tpu7x:2x2x1
jax: 0.10.0
libtpu: 0.0.40
codegen_flags: <defaults>
</compile_context>

<pallas_src>
import jax
import jax.numpy as jnp
from jax.experimental import pallas as pl
from jax.experimental.pallas import tpu as pltpu


def _round_up(v, m):
    return ((v + m - 1) // m) * m


def _sublane_multiple(dtype):
    # Packed sublane rows: f32 -> 8, bf16 -> 16, int8/fp8 -> 32.
    return max(8, 32 // jnp.dtype(dtype).itemsize)


# --------------------------------------------------------------------------
# Kernels
# --------------------------------------------------------------------------

def _mm_kernel_single_k(x_ref, w_ref, o_ref):
    # Whole contraction in one tile: no pl.when, no scratch.
    o_ref[...] = jnp.dot(
        x_ref[...], w_ref[...], preferred_element_type=jnp.float32
    ).astype(o_ref.dtype)


def _mm_kernel_f32_out(x_ref, w_ref, o_ref):
    # f32 output: accumulate directly into the resident output tile
    # (saves tm*tn*4 B of VMEM + a finalize copy).
    @pl.when(pl.program_id(2) == 0)
    def _():
        o_ref[...] = jnp.zeros_like(o_ref)

    o_ref[...] += jnp.dot(x_ref[...], w_ref[...], preferred_element_type=jnp.float32)


def _mm_kernel_acc(x_ref, w_ref, o_ref, acc_ref):
    # Generic path (non-f32 output): f32 scratch accumulator, cast at the end.
    @pl.when(pl.program_id(2) == 0)
    def _():
        acc_ref[...] = jnp.zeros_like(acc_ref)

    acc_ref[...] += jnp.dot(x_ref[...], w_ref[...], preferred_element_type=jnp.float32)

    @pl.when(pl.program_id(2) == pl.num_programs(2) - 1)
    def _():
        o_ref[...] = acc_ref[...].astype(o_ref.dtype)


# --------------------------------------------------------------------------
# Tiling heuristics
# --------------------------------------------------------------------------

def _choose_kn_tiles(K, N):
    """Pick (tk, tn). tk is the primary lever; tn in multiples of 256."""
    kp = _round_up(K, 128)
    np_ = _round_up(N, 128)
    if kp >= 1024:
        tk = 1024
    elif kp >= 512:
        tk = 512
    elif kp >= 256:
        tk = 256
    else:
        tk = kp
    if np_ >= 512:
        tn = 512
    elif np_ >= 256:
        tn = 256
    else:
        tn = np_
    return tk, tn


def _choose_m_tile(B, sublane):
    bs = _round_up(B, sublane)
    if bs <= 256:
        return bs  # single M tile, no extra row padding
    return 256


# --------------------------------------------------------------------------
# Pallas linear
# --------------------------------------------------------------------------

def _linear_pallas(x, w_t, *, n_valid, tm, tk, tn, out_dtype):
    """x: [B, K] (already in compute dtype); w_t: [Kp, Np] pre-transposed/padded."""
    B, K = x.shape
    Kp, Np = w_t.shape

    Bp = _round_up(B, tm)
    if (Bp, Kp) != (B, K):
        x = jnp.pad(x, ((0, Bp - B), (0, Kp - K)))

    mt, nt, kt = Bp // tm, Np // tn, Kp // tk
    in_itemsize = jnp.dtype(x.dtype).itemsize
    out_itemsize = jnp.dtype(out_dtype).itemsize

    # Bytes reflect actual streaming: x re-read once per N tile, weight once
    # per M tile, output written once.
    cost = pl.CostEstimate(
        flops=2 * Bp * Np * Kp,
        transcendentals=0,
        bytes_accessed=(
            Bp * Kp * in_itemsize * nt
            + Kp * Np * in_itemsize * mt
            + Bp * Np * out_itemsize
        ),
    )

    # Double-buffered pipeline footprint (inputs + output tiles).
    vmem_bytes = 2 * (tm * tk + tk * tn + tm * tn) * max(in_itemsize, out_itemsize)

    if kt == 1:
        grid = (mt, nt)
        kernel = _mm_kernel_single_k
        in_specs = [
            pl.BlockSpec((tm, tk), lambda i, j: (i, 0)),
            pl.BlockSpec((tk, tn), lambda i, j: (0, j)),
        ]
        out_spec = pl.BlockSpec((tm, tn), lambda i, j: (i, j))
        scratch = []
        dims = ("parallel", "parallel")
    else:
        grid = (mt, nt, kt)
        in_specs = [
            pl.BlockSpec((tm, tk), lambda i, j, k: (i, k)),
            pl.BlockSpec((tk, tn), lambda i, j, k: (k, j)),
        ]
        out_spec = pl.BlockSpec((tm, tn), lambda i, j, k: (i, j))
        dims = ("parallel", "parallel", "arbitrary")
        if jnp.dtype(out_dtype) == jnp.float32:
            kernel = _mm_kernel_f32_out
            scratch = []
        else:
            kernel = _mm_kernel_acc
            scratch = [pltpu.VMEM((tm, tn), jnp.float32)]
            vmem_bytes += tm * tn * 4

    # >= 16 MiB covers v5e's small scoped default; <= 32 MiB stays safe on
    # v7x's 64 MiB physical VMEM.
    vmem_limit = int(min(32 * 1024 * 1024, max(16 * 1024 * 1024, 2 * vmem_bytes)))

    out_padded = pl.pallas_call(
        kernel,
        out_shape=jax.ShapeDtypeStruct((Bp, Np), out_dtype),
        grid=grid,
        in_specs=in_specs,
        out_specs=out_spec,
        scratch_shapes=scratch,
        compiler_params=pltpu.CompilerParams(
            dimension_semantics=dims,
            vmem_limit_bytes=vmem_limit,
        ),
        cost_estimate=cost,
    )(x, w_t)

    if Bp == B and Np == n_valid:
        return out_padded
    return out_padded[:B, :n_valid]


# --------------------------------------------------------------------------
# SGLNet module
# --------------------------------------------------------------------------

class SGLNetPallas:
    """Pallas TPU SGLNet: out = x @ weight.T (bias-free nn.Linear).

    Weight layout work (transpose / optional cast / zero-pad) is done ONCE at
    construction; forward only streams x, weight and the output.
    """

    def __init__(self, weight, *, compute_dtype=None):
        # weight: [N, K] in PyTorch nn.Linear convention.
        self.N, self.K = weight.shape
        self.compute_dtype = None if compute_dtype is None else jnp.dtype(compute_dtype)
        self._weight_raw = weight  # only used on the tiny-shape fallback path

        w_dtype = self.compute_dtype if self.compute_dtype is not None else weight.dtype
        self._sublane = _sublane_multiple(w_dtype)
        self.tk, self.tn = _choose_kn_tiles(self.K, self.N)

        Kp = _round_up(self.K, self.tk)
        Np = _round_up(self.N, self.tn)
        w_t = weight.T.astype(w_dtype)  # [K, N]: lane-dense RHS, contraction leading
        if (Kp, Np) != (self.K, self.N):
            w_t = jnp.pad(w_t, ((0, Kp - self.K), (0, Np - self.N)))
        self.w_t = w_t

    def __call__(self, x):
        B, K = x.shape
        assert K == self.K, "input_size mismatch"
        out_dtype = x.dtype

        # Sub-tile shapes: the cost would be entirely pad/launch/slice
        # overhead; XLA's fused matmul wins by a wide margin.
        if B <= 128 and _round_up(K, 128) <= 128 and _round_up(self.N, 128) <= 128:
            return jnp.dot(x, self._weight_raw.T.astype(x.dtype))

        if self.compute_dtype is not None:
            x = x.astype(self.compute_dtype)

        tm = _choose_m_tile(B, self._sublane)
        return _linear_pallas(
            x, self.w_t, n_valid=self.N, tm=tm, tk=self.tk, tn=self.tn,
            out_dtype=out_dtype,
        )


# --------------------------------------------------------------------------
# Test
# --------------------------------------------------------------------------

if __name__ == "__main__":
    key = jax.random.PRNGKey(0)
    kx, kw, kx2, kw2 = jax.random.split(key, 4)

    # --- Kernel path: big enough to use the tiled Pallas matmul (multi-K). ---
    batch, input_size, output_size = 64, 384, 256
    x = jax.random.normal(kx, (batch, input_size), dtype=jnp.float32)
    # nn.init.normal_(weight, 0.0, 1.0): shape (output_size, input_size).
    weight = jax.random.normal(kw, (output_size, input_size), dtype=jnp.float32)

    model = SGLNetPallas(weight)  # exact f32 path
    out = jax.block_until_ready(jax.jit(model.__call__)(x))
    ref = jnp.dot(x, weight.T, precision=jax.lax.Precision.HIGHEST)
    assert out.shape == (batch, output_size)
    assert out.dtype == jnp.float32
    assert jnp.allclose(out, ref, atol=1e-2, rtol=1e-3), float(
        jnp.max(jnp.abs(out - ref))
    )

    # --- bf16 compute path (native MXU fast path on v6e/v7x). ---
    model_bf16 = SGLNetPallas(weight, compute_dtype=jnp.bfloat16)
    out_bf = jax.block_until_ready(jax.jit(model_bf16.__call__)(x))
    ref_bf = jnp.dot(
        x.astype(jnp.bfloat16), weight.T.astype(jnp.bfloat16),
        preferred_element_type=jnp.float32,
    )
    assert out_bf.shape == (batch, output_size)
    assert out_bf.dtype == jnp.float32
    assert jnp.allclose(out_bf, ref_bf, atol=5e-2, rtol=1e-2), float(
        jnp.max(jnp.abs(out_bf - ref_bf))
    )

    # --- Tiny toy shape (matches knock71): hits the XLA fallback path. ---
    x_small = jax.random.normal(kx2, (8, 32), dtype=jnp.float32)
    w_small = jax.random.normal(kw2, (16, 32), dtype=jnp.float32)
    out_small = jax.block_until_ready(SGLNetPallas(w_small)(x_small))
    assert out_small.shape == (8, 16)
    assert jnp.allclose(out_small, x_small @ w_small.T, atol=1e-4, rtol=1e-5)

    print("KERNEL_OK")
</pallas_src>

<mosaic_0001>
module attributes {stable_mosaic.version = 11 : i64} {
  func.func @_mm_kernel_f32_out(%arg0: i32, %arg1: i32, %arg2: i32, %arg3: memref<64x256xf32, #tpu.memory_space<vmem>>, %arg4: memref<256x256xf32, #tpu.memory_space<vmem>>, %arg5: memref<64x256xf32, #tpu.memory_space<vmem>>) attributes {dimension_semantics = [#tpu.dimension_semantics<parallel>, #tpu.dimension_semantics<parallel>, #tpu.dimension_semantics<arbitrary>], iteration_bounds = array<i64: 1, 1, 2>, scalar_prefetch = 0 : i64, scratch_operands = 0 : i64, tpu.core_type = #tpu.core_type<tc>, window_params = [{transform_indices = @transform_0, window_bounds = array<i64: 64, 256>}, {transform_indices = @transform_1, window_bounds = array<i64: 256, 256>}, {transform_indices = @transform_2, window_bounds = array<i64: 64, 256>}]} {
    %c0_i32 = arith.constant 0 : i32
    %0 = arith.cmpi eq, %arg2, %c0_i32 : i32
    %1 = arith.extui %0 : i1 to i32
    %c0_i32_0 = arith.constant 0 : i32
    %2 = arith.cmpi ne, %1, %c0_i32_0 : i32
    scf.if %2 {
      %cst_8 = arith.constant 0.000000e+00 : f32
      %9 = vector.broadcast %cst_8 : f32 to vector<64x256xf32>
      %c0_9 = arith.constant 0 : index
      %c0_10 = arith.constant 0 : index
      %10 = vector.load %arg5[%c0_9, %c0_10] : memref<64x256xf32, #tpu.memory_space<vmem>>, vector<64x256xf32>
      tpu.vector_store %arg5[%c0_9, %c0_10], %9 {strides = array<i32>} : memref<64x256xf32, #tpu.memory_space<vmem>>, vector<64x256xf32>,
    } else {
    }
    %c0 = arith.constant 0 : index
    %c0_1 = arith.constant 0 : index
    %3 = vector.load %arg5[%c0, %c0_1] : memref<64x256xf32, #tpu.memory_space<vmem>>, vector<64x256xf32>
    %c0_2 = arith.constant 0 : index
    %c0_3 = arith.constant 0 : index
    %4 = vector.load %arg3[%c0_2, %c0_3] : memref<64x256xf32, #tpu.memory_space<vmem>>, vector<64x256xf32>
    %c0_4 = arith.constant 0 : index
    %c0_5 = arith.constant 0 : index
    %5 = vector.load %arg4[%c0_4, %c0_5] : memref<256x256xf32, #tpu.memory_space<vmem>>, vector<256x256xf32>
    %cst = arith.constant dense<0.000000e+00> : vector<64x256xf32>
    %6 = tpu.matmul %4, %5, %cst {dimension_numbers = #tpu.dot_dimension_numbers<[1], [0], [0], [1], [0, 0, 1, 1], [], []>} : vector<64x256xf32>, vector<256x256xf32>, vector<64x256xf32> -> vector<64x256xf32>
    %7 = arith.addf %3, %6 : vector<64x256xf32>
    %c0_6 = arith.constant 0 : index
    %c0_7 = arith.constant 0 : index
    %8 = vector.load %arg5[%c0_6, %c0_7] : memref<64x256xf32, #tpu.memory_space<vmem>>, vector<64x256xf32>
    tpu.vector_store %arg5[%c0_6, %c0_7], %7 {strides = array<i32>} : memref<64x256xf32, #tpu.memory_space<vmem>>, vector<64x256xf32>,
    return
  }
  func.func @transform_0(%arg0: i32, %arg1: i32, %arg2: i32) -> (i32, i32) {
    %c0_i32 = arith.constant 0 : i32
    return %arg0, %arg2 : i32, i32
  }
  func.func @transform_1(%arg0: i32, %arg1: i32, %arg2: i32) -> (i32, i32) {
    %c0_i32 = arith.constant 0 : i32
    return %arg2, %arg1 : i32, i32
  }
  func.func @transform_2(%arg0: i32, %arg1: i32, %arg2: i32) -> (i32, i32) {
    %c0_i32 = arith.constant 0 : i32
    return %arg0, %arg1 : i32, i32
  }
}

</mosaic_0001>

<llo_original>
// kernel: a_call__.1
$region0: #{a_call__.1}
  #allocation0 [shape = 'u32[]', space=smem, size = 0x4, offset = 0x4, fixed_abs, tag = 'smem constant byte address 0x4 - core index']
  #allocation1 [shape = 'u32[144,128]{1,0:T(1,128)}', space=vmem, size = 0x12000, scoped, tag = 'internal scratch']
  %s0 = inlined_call_operand.vmem [shape: f32[64,512], index: 0, kind: input, shape index: {}]
  %s1 = inlined_call_operand.hbm [shape: f32[512,256], index: 1, kind: input, shape index: {}]
  %s2 = inlined_call_operand.hbm [shape: f32[64,256], index: 2, kind: output, shape index: {}]
  %s3 = sld [smem:[#allocation0]]
  $region72: #{a_call__.1} parent=0
    _
  %s5 = ssub.s32 1, %s3
  %s6 = scalar_select 0, %s5, %s3
  $region1: #{a_call__.1} parent=0
    #allocation2 [shape = 'u8[131072]{0}', space=vmem, size = 0x20000, scoped, tag = 'input window, operand 0']
    #allocation3 [shape = 'u8[524288]{0}', space=vmem, size = 0x80000, scoped, tag = 'input window, operand 1']
    #allocation4 [shape = 's32[2]{0}', space=sflag, size = 0x8, scoped, tag = 'scoped memory for a_call__.1']
    #allocation5 [shape = 's32[2]{0}', space=sflag, size = 0x8, scoped, tag = 'scoped memory for a_call__.1']
    #allocation6 [shape = 'u8[65536]{0}', space=vmem, size = 0x10000, scoped, tag = 'output window, operand 0, single buffered']
    %7 = vsyncpa [#allocation4], 0
    %s8 = scalar_lea.sflag [#allocation4], 1
    %9 = vsyncpa %s8, 0
    %10 = vsyncpa [#allocation5], 0
    loop: start=0, step=1, limit=4
    $region2: #{a_call__.1} parent=1 // loop_pre_header
      _
    $region3: #{a_call__.1} parent=1 // loop_header
      %s12 = sphi 0, %s16
      %p13 = scmp.ge.s32.totalorder %s12, 4
      %s19 = sphi 0, %s38
      %s20 = sphi 0, %s34
      %s21 = sphi 0, %s30
      %s22 = sphi 0, %s19
      %s23 = sphi 0, %s20
      %s24 = sphi 0, %s21
      %s25 = sphi 0, %s22
      %s26 = sphi 0, %s23
      %s27 = sphi 0, %s24
      %s43 = sphi 0, %s45
      %s46 = sphi 0, %s43
      %s47 = sphi 0, %s46
      %s63 = sphi 0, %s47
      %s71 = sphi 0, %s73
      %s74 = sphi 0, %s71
      %s75 = sphi 0, %s74
      %s91 = sphi 0, %s75
      %s99 = sphi 0, %s101
      %s102 = sphi 0, %s99
      %s103 = sphi 0, %s102
      %s119 = sphi 0, %s103
    $region4: #{a_call__.1} parent=1 // loop_header_branch
      %15 = sbr.rel (%p13) target = $region8
    $region5: #{a_call__.1} parent=1 // loop_body
      %s17 = ssub.s32 %s12, 1
      %s18 = ssub.s32 %s12, 2
      %s28 = sadd.s32 1, %s21
      %p29 = scmp.ge.s32.totalorder %s28, 2
      %s30 = scalar_select %p29, 0, %s28
      %s31 = sadd.s32 1, %s20
      %s32 = scalar_select %p29, %s31, %s20
      %p33 = scmp.ge.s32.totalorder %s32, 1
      %s34 = scalar_select %p33, 0, %s32
      %s35 = sadd.s32 1, %s19
      %s36 = scalar_select %p33, %s35, %s19
      %p37 = scmp.ge.s32.totalorder %s36, 1
      %s38 = scalar_select %p37, 0, %s36
      %s39 = ssub.s32 %s19, %s38
      %s40 = ssub.s32 %s21, %s30
      %s41 = sor.u32 %s39, %s40
      %p42 = scmp.eq.s32.totalorder %s41, 0
      %s44 = sadd.s32 %s43, 1
      %s45 = scalar_select %p42, %s43, %s44
      %p48 = pneg %p42
      %p49 = scmp.eq.s32.totalorder %s12, 1
      %p50 = por %p48, %p49
      %p51 = scmp.ne.s32.totalorder %s43, %s46
      %p52 = scmp.eq.s32.totalorder %s12, 0
      %p53 = por %p51, %p52
      %p54 = scmp.ne.s32.totalorder %s43, %s46
      %p55 = scmp.eq.s32.totalorder %s17, 1
      %p56 = por %p54, %p55
      %p57 = scmp.ne.s32.totalorder %s46, %s47
      %p58 = scmp.eq.s32.totalorder %s17, 0
      %p59 = por %p57, %p58
      %p60 = scmp.ne.s32.totalorder %s46, %s47
      %p61 = scmp.eq.s32.totalorder %s18, 1
      %p62 = por %p60, %p61
      %p64 = scmp.ne.s32.totalorder %s47, %s63
      %p65 = scmp.eq.s32.totalorder %s18, 0
      %p66 = por %p64, %p65
      %s67 = ssub.s32 %s21, %s30
      %s68 = ssub.s32 %s20, %s34
      %s69 = sor.u32 %s67, %s68
      %p70 = scmp.eq.s32.totalorder %s69, 0
      %s72 = sadd.s32 %s71, 1
      %s73 = scalar_select %p70, %s71, %s72
      %p76 = pneg %p70
      %p77 = scmp.eq.s32.totalorder %s12, 1
      %p78 = por %p76, %p77
      %p79 = scmp.ne.s32.totalorder %s71, %s74
      %p80 = scmp.eq.s32.totalorder %s12, 0
      %p81 = por %p79, %p80
      %p82 = scmp.ne.s32.totalorder %s71, %s74
      %p83 = scmp.eq.s32.totalorder %s17, 1
      %p84 = por %p82, %p83
      %p85 = scmp.ne.s32.totalorder %s74, %s75
      %p86 = scmp.eq.s32.totalorder %s17, 0
      %p87 = por %p85, %p86
      %p88 = scmp.ne.s32.totalorder %s74, %s75
      %p89 = scmp.eq.s32.totalorder %s18, 1
      %p90 = por %p88, %p89
      %p92 = scmp.ne.s32.totalorder %s75, %s91
      %p93 = scmp.eq.s32.totalorder %s18, 0
      %p94 = por %p92, %p93
      %s95 = ssub.s32 %s19, %s38
      %s96 = ssub.s32 %s20, %s34
      %s97 = sor.u32 %s95, %s96
      %p98 = scmp.eq.s32.totalorder %s97, 0
      %s100 = sadd.s32 %s99, 1
      %s101 = scalar_select %p98, %s99, %s100
      %p104 = pneg %p98
      %p105 = scmp.eq.s32.totalorder %s12, 1
      %p106 = por %p104, %p105
      %p107 = scmp.ne.s32.totalorder %s99, %s102
      %p108 = scmp.eq.s32.totalorder %s12, 0
      %p109 = por %p107, %p108
      %p110 = scmp.ne.s32.totalorder %s99, %s102
      %p111 = scmp.eq.s32.totalorder %s17, 1
      %p112 = por %p110, %p111
      %p113 = scmp.ne.s32.totalorder %s102, %s103
      %p114 = scmp.eq.s32.totalorder %s17, 0
      %p115 = por %p113, %p114
      %p116 = scmp.ne.s32.totalorder %s102, %s103
      %p117 = scmp.eq.s32.totalorder %s18, 1
      %p118 = por %p116, %p117
      %p120 = scmp.ne.s32.totalorder %s103, %s119
      %p121 = scmp.eq.s32.totalorder %s18, 0
      %p122 = por %p120, %p121
      %p123 = scmp.le.s32.totalorder 1, %s12
      %p124 = scmp.lt.s32.totalorder %s12, 3
      %p125 = pnand %p123, %p124
      %p126 = pneg %p125
      // Predicated region
      $region9: #{a_call__.1} parent=5 // pred_check
        _
      $region10: #{a_call__.1} parent=5 // pred_check_branch
        %128 = sbr.rel (%p125) target = $region12
      $region11: #{a_call__.1} parent=5 // pred_region
        %s129 = ssub.s32 %s12, 1
      $region12: #{a_call__.1} parent=5 // pred_fallthru
        _
      %p130 = scmp.lt.s32.totalorder %s12, 2
      // Predicated region
      $region13: #{a_call__.1} parent=5 // pred_check
        %p131 = pneg %p130
      $region14: #{a_call__.1} parent=5 // pred_check_branch
        %133 = sbr.rel (%p131) target = $region16
      $region15: #{a_call__.1} parent=5 // pred_region
        // Predicated region
        $region17: #{a_call__.1} parent=15 // pred_check
          %p134 = pneg %p53
        $region18: #{a_call__.1} parent=15 // pred_check_branch
          %136 = sbr.rel (%p134) target = $region20
        $region19: #{a_call__.1} parent=15 // pred_region
          %s137 = sand.u32 %s43, 1
          %s138 = sand.u32 %s43, 1
          %s139 = smul.addr %s138, 128
          %s140 = scalar_lea.vmem [#allocation2], %s139
          %s141 = smul.u32 8, %s19
          %s142 = smul.u32 2, %s21
          %s143 = smul.addr %s141, 4
          %s144 = sadd.s32 %s142, %s143
          %s145 = smul.addr %s144, 8
          %s146 = scalar_lea.vmem %s0, %s145
          // Predicated region
          $region21: #{a_call__.1} parent=19 // pred_check
            _
          $region22: #{a_call__.1} parent=19 // pred_check_branch
            %148 = sbr.rel (0) target = $region24
          $region23: #{a_call__.1} parent=19 // pred_region
            // Predicated region
            $region25: #{a_call__.1} parent=23 // pred_check
              _
            $region26: #{a_call__.1} parent=23 // pred_check_branch
              %150 = sbr.rel (0) target = $region28
            $region27: #{a_call__.1} parent=23 // pred_region
              loop: start=0, step=1, limit=1
              $region29: #{a_call__.1} parent=27 // loop_pre_header
                _
              $region30: #{a_call__.1} parent=27 // loop_header
                %s152 = sphi 0, %s156
                %p153 = scmp.ge.s32.totalorder %s152, 1
                %s157 = sphi %s146, %s146
                %s158 = sphi %s140, %s140
              $region31: #{a_call__.1} parent=27 // loop_header_branch
                %155 = sbr.rel (%p153) target = $region35
              $region32: #{a_call__.1} parent=27 // loop_body
                %v159 = vld [vmem:[%s157] sm:$0xff]
                %160 = vst [vmem:[%s158] sm:$0xff] %v159
                %v161 = vld [vmem:[%s157 + $0x8] sm:$0xff]
                %162 = vst [vmem:[%s158 + $0x8] sm:$0xff] %v161
                %v163 = vld [vmem:[%s157 + $0x20] sm:$0xff]
                %164 = vst [vmem:[%s158 + $0x10] sm:$0xff] %v163
                %v165 = vld [vmem:[%s157 + $0x28] sm:$0xff]
                %166 = vst [vmem:[%s158 + $0x18] sm:$0xff] %v165
                %v167 = vld [vmem:[%s157 + $0x40] sm:$0xff]
                %168 = vst [vmem:[%s158 + $0x20] sm:$0xff] %v167
                %v169 = vld [vmem:[%s157 + $0x48] sm:$0xff]
                %170 = vst [vmem:[%s158 + $0x28] sm:$0xff] %v169
                %v171 = vld [vmem:[%s157 + $0x60] sm:$0xff]
                %172 = vst [vmem:[%s158 + $0x30] sm:$0xff] %v171
                %v173 = vld [vmem:[%s157 + $0x68] sm:$0xff]
                %174 = vst [vmem:[%s158 + $0x38] sm:$0xff] %v173
                %v175 = vld [vmem:[%s157 + $0x80] sm:$0xff]
                %176 = vst [vmem:[%s158 + $0x40] sm:$0xff] %v175
                %v177 = vld [vmem:[%s157 + $0x88] sm:$0xff]
                %178 = vst [vmem:[%s158 + $0x48] sm:$0xff] %v177
                %v179 = vld [vmem:[%s157 + $0xa0] sm:$0xff]
                %180 = vst [vmem:[%s158 + $0x50] sm:$0xff] %v179
                %v181 = vld [vmem:[%s157 + $0xa8] sm:$0xff]
                %182 = vst [vmem:[%s158 + $0x58] sm:$0xff] %v181
                %v183 = vld [vmem:[%s157 + $0xc0] sm:$0xff]
                %184 = vst [vmem:[%s158 + $0x60] sm:$0xff] %v183
                %v185 = vld [vmem:[%s157 + $0xc8] sm:$0xff]
                %186 = vst [vmem:[%s158 + $0x68] sm:$0xff] %v185
                %v187 = vld [vmem:[%s157 + $0xe0] sm:$0xff]
                %188 = vst [vmem:[%s158 + $0x70] sm:$0xff] %v187
                %v189 = vld [vmem:[%s157 + $0xe8] sm:$0xff]
                %190 = vst [vmem:[%s158 + $0x78] sm:$0xff] %v189
              $region33: #{a_call__.1} parent=27 // loop_footer
                %s156 = sadd.s32 1, %s152
              $region34: #{a_call__.1} parent=27 // loop_footer_branch
                %151 = sbr.rel target = $region30
              $region35: #{a_call__.1} parent=27 // loop_exit
                _
            $region28: #{a_call__.1} parent=23 // pred_fallthru
              _
            // Predicated region
            $region36: #{a_call__.1} parent=23 // pred_check
              _
            $region37: #{a_call__.1} parent=23 // pred_check_branch
              %192 = sbr.rel target = $region39
            $region38: #{a_call__.1} parent=23 // pred_region
              _
            $region39: #{a_call__.1} parent=23 // pred_fallthru
              _
          $region24: #{a_call__.1} parent=19 // pred_fallthru
            _
          %193 = vnop
        $region20: #{a_call__.1} parent=15 // pred_fallthru
          _
        // Predicated region
        $region40: #{a_call__.1} parent=15 // pred_check
          %p194 = pneg %p81
        $region41: #{a_call__.1} parent=15 // pred_check_branch
          %196 = sbr.rel (%p194) target = $region43
        $region42: #{a_call__.1} parent=15 // pred_region
          %s197 = sand.u32 %s71, 1
          %s198 = scalar_lea.sflag [#allocation4], %s197
          %s199 = sand.u32 %s71, 1
          %s200 = smul.addr %s199, 512
          %s201 = scalar_lea.vmem [#allocation3], %s200
          %s202 = smul.u32 32, %s21
          %s203 = smul.u32 2, %s20
          %s205 = ssub.s32 8192, 8192
          %206 = vsyncadd %s198, %s205
          %s207 = smul.addr %s202, 2
          %s208 = sadd.s32 %s203, %s207
          %s209 = smul.addr %s208, 128
          %s210 = scalar_lea.hbm %s1, %s209
          %s211 = sshll.u32 %s201, 4
          %s212 = int_to_ptr.vmem [resolvable:$true] %s211
          %217 = dma.hbm_to_vmem [thread:$0]  %s210, 8192, %s212, %s198, 256, 256, 16
        $region43: #{a_call__.1} parent=15 // pred_fallthru
          _
      $region16: #{a_call__.1} parent=5 // pred_fallthru
        _
      %p218 = scmp.le.s32.totalorder 1, %s12
      %p219 = scmp.lt.s32.totalorder %s12, 3
      %p220 = pnand %p218, %p219
      %p221 = pneg %p220
      // Predicated region
      $region44: #{a_call__.1} parent=5 // pred_check
        _
      $region45: #{a_call__.1} parent=5 // pred_check_branch
        %223 = sbr.rel (%p220) target = $region47
      $region46: #{a_call__.1} parent=5 // pred_region
        %s224 = ssub.s32 %s12, 1
        %s225 = sand.u32 %s46, 1
        %s226 = sand.u32 %s46, 1
        %s227 = smul.addr %s226, 128
        %s228 = scalar_lea.vmem [#allocation2], %s227
        // Predicated region
        $region48: #{a_call__.1} parent=46 // pred_check
          %p229 = pneg %p59
        $region49: #{a_call__.1} parent=46 // pred_check_branch
          %231 = sbr.rel (%p229) target = $region51
        $region50: #{a_call__.1} parent=46 // pred_region
          _
        $region51: #{a_call__.1} parent=46 // pred_fallthru
          _
        %s232 = sand.u32 %s74, 1
        %s233 = scalar_lea.sflag [#allocation4], %s232
        %s234 = sand.u32 %s74, 1
        %s235 = smul.addr %s234, 512
        %s236 = scalar_lea.vmem [#allocation3], %s235
        // Predicated region
        $region52: #{a_call__.1} parent=46 // pred_check
          %p237 = pneg %p87
        $region53: #{a_call__.1} parent=46 // pred_check_branch
          %239 = sbr.rel (%p237) target = $region55
        $region54: #{a_call__.1} parent=46 // pred_region
          %240 = dma.done %s233, 8192
        $region55: #{a_call__.1} parent=46 // pred_fallthru
          _
        %s241 = sand.u32 %s46, 1
        %s242 = sand.u32 %s46, 1
        %s243 = smul.addr %s242, 128
        %s244 = scalar_lea.vmem [#allocation2], %s243
        %p245 = pneg %p59
        %p246 = pneg %p56
        %s247 = sand.u32 %s74, 1
        %s248 = scalar_lea.sflag [#allocation4], %s247
        %s249 = sand.u32 %s74, 1
        %s250 = smul.addr %s249, 512
        %s251 = scalar_lea.vmem [#allocation3], %s250
        %p252 = pneg %p87
        %p253 = pneg %p84
        %p254 = pneg %p115
        %p255 = pneg %p112
        %s256 = smul.u32 8, %s22
        %s257 = smul.u32 2, %s24
        %s258 = smul.u32 32, %s24
        %s259 = smul.u32 2, %s23
        %s260 = smul.u32 8, %s22
        %s261 = smul.u32 2, %s23
        %p262 = scmp.eq.s32.totalorder %s24, 0
        // Predicated region
        $region56: #{a_call__.1} parent=46 // pred_check
          %p263 = pneg %p262
        $region57: #{a_call__.1} parent=46 // pred_check_branch
          %265 = sbr.rel (%p263) target = $region59
        $region58: #{a_call__.1} parent=46 // pred_region
          %266 = vst [vmem:[#allocation6] sm:$0xff] 0.0
          %267 = vst [vmem:[#allocation6 + $0x8] sm:$0xff] 0.0
          %268 = vst [vmem:[#allocation6 + $0x10] sm:$0xff] 0.0
          %269 = vst [vmem:[#allocation6 + $0x18] sm:$0xff] 0.0
          %270 = vst [vmem:[#allocation6 + $0x20] sm:$0xff] 0.0
          %271 = vst [vmem:[#allocation6 + $0x28] sm:$0xff] 0.0
          %272 = vst [vmem:[#allocation6 + $0x30] sm:$0xff] 0.0
          %273 = vst [vmem:[#allocation6 + $0x38] sm:$0xff] 0.0
          %274 = vst [vmem:[#allocation6 + $0x40] sm:$0xff] 0.0
          %275 = vst [vmem:[#allocation6 + $0x48] sm:$0xff] 0.0
          %276 = vst [vmem:[#allocation6 + $0x50] sm:$0xff] 0.0
          %277 = vst [vmem:[#allocation6 + $0x58] sm:$0xff] 0.0
          %278 = vst [vmem:[#allocation6 + $0x60] sm:$0xff] 0.0
          %279 = vst [vmem:[#allocation6 + $0x68] sm:$0xff] 0.0
          %280 = vst [vmem:[#allocation6 + $0x70] sm:$0xff] 0.0
          %281 = vst [vmem:[#allocation6 + $0x78] sm:$0xff] 0.0
        $region59: #{a_call__.1} parent=46 // pred_fallthru
          _
        %v282 = vld [vmem:[#allocation6] sm:$0xff]
        %v283 = vld [vmem:[#allocation6 + $0x8] sm:$0xff]
        %v284 = vld [vmem:[#allocation6 + $0x10] sm:$0xff]
        %v285 = vld [vmem:[#allocation6 + $0x18] sm:$0xff]
        %v286 = vld [vmem:[#allocation6 + $0x20] sm:$0xff]
        %v287 = vld [vmem:[#allocation6 + $0x28] sm:$0xff]
        %v288 = vld [vmem:[#allocation6 + $0x30] sm:$0xff]
        %v289 = vld [vmem:[#allocation6 + $0x38] sm:$0xff]
        %v290 = vld [vmem:[#allocation6 + $0x40] sm:$0xff]
        %v291 = vld [vmem:[#allocation6 + $0x48] sm:$0xff]
        %v292 = vld [vmem:[#allocation6 + $0x50] sm:$0xff]
        %v293 = vld [vmem:[#allocation6 + $0x58] sm:$0xff]
        %v294 = vld [vmem:[#allocation6 + $0x60] sm:$0xff]
        %v295 = vld [vmem:[#allocation6 + $0x68] sm:$0xff]
        %v296 = vld [vmem:[#allocation6 + $0x70] sm:$0xff]
        %v297 = vld [vmem:[#allocation6 + $0x78] sm:$0xff]
        %v298 = vld [vmem:[%s228] sm:$0xff]
        %v299 = vld [vmem:[%s228 + $0x8] sm:$0xff]
        %v300 = vld [vmem:[%s228 + $0x10] sm:$0xff]
        %v301 = vld [vmem:[%s228 + $0x18] sm:$0xff]
        %v302 = vld [vmem:[%s228 + $0x20] sm:$0xff]
        %v303 = vld [vmem:[%s228 + $0x28] sm:$0xff]
        %v304 = vld [vmem:[%s228 + $0x30] sm:$0xff]
        %v305 = vld [vmem:[%s228 + $0x38] sm:$0xff]
        %v306 = vld [vmem:[%s228 + $0x40] sm:$0xff]
        %v307 = vld [vmem:[%s228 + $0x48] sm:$0xff]
        %v308 = vld [vmem:[%s228 + $0x50] sm:$0xff]
        %v309 = vld [vmem:[%s228 + $0x58] sm:$0xff]
        %v310 = vld [vmem:[%s228 + $0x60] sm:$0xff]
        %v311 = vld [vmem:[%s228 + $0x68] sm:$0xff]
        %v312 = vld [vmem:[%s228 + $0x70] sm:$0xff]
        %v313 = vld [vmem:[%s228 + $0x78] sm:$0xff]
        %v314 = vld [vmem:[%s236] sm:$0xff]
        %v315 = vld [vmem:[%s236 + $0x8] sm:$0xff]
        %v316 = vld [vmem:[%s236 + $0x10] sm:$0xff]
        %v317 = vld [vmem:[%s236 + $0x18] sm:$0xff]
        %v318 = vld [vmem:[%s236 + $0x20] sm:$0xff]
        %v319 = vld [vmem:[%s236 + $0x28] sm:$0xff]
        %v320 = vld [vmem:[%s236 + $0x30] sm:$0xff]
        %v321 = vld [vmem:[%s236 + $0x38] sm:$0xff]
        %v322 = vld [vmem:[%s236 + $0x40] sm:$0xff]
        %v323 = vld [vmem:[%s236 + $0x48] sm:$0xff]
        %v324 = vld [vmem:[%s236 + $0x50] sm:$0xff]
        %v325 = vld [vmem:[%s236 + $0x58] sm:$0xff]
        %v326 = vld [vmem:[%s236 + $0x60] sm:$0xff]
        %v327 = vld [vmem:[%s236 + $0x68] sm:$0xff]
        %v328 = vld [vmem:[%s236 + $0x70] sm:$0xff]
        %v329 = vld [vmem:[%s236 + $0x78] sm:$0xff]
        %v330 = vld [vmem:[%s236 + $0x80] sm:$0xff]
        %v331 = vld [vmem:[%s236 + $0x88] sm:$0xff]
        %v332 = vld [vmem:[%s236 + $0x90] sm:$0xff]
        %v333 = vld [vmem:[%s236 + $0x98] sm:$0xff]
        %v334 = vld [vmem:[%s236 + $0xa0] sm:$0xff]
        %v335 = vld [vmem:[%s236 + $0xa8] sm:$0xff]
        %v336 = vld [vmem:[%s236 + $0xb0] sm:$0xff]
        %v337 = vld [vmem:[%s236 + $0xb8] sm:$0xff]
        %v338 = vld [vmem:[%s236 + $0xc0] sm:$0xff]
        %v339 = vld [vmem:[%s236 + $0xc8] sm:$0xff]
        %v340 = vld [vmem:[%s236 + $0xd0] sm:$0xff]
        %v341 = vld [vmem:[%s236 + $0xd8] sm:$0xff]
        %v342 = vld [vmem:[%s236 + $0xe0] sm:$0xff]
        %v343 = vld [vmem:[%s236 + $0xe8] sm:$0xff]
        %v344 = vld [vmem:[%s236 + $0xf0] sm:$0xff]
        %v345 = vld [vmem:[%s236 + $0xf8] sm:$0xff]
        %v346 = vld [vmem:[%s236 + $0x100] sm:$0xff]
        %v347 = vld [vmem:[%s236 + $0x108] sm:$0xff]
        %v348 = vld [vmem:[%s236 + $0x110] sm:$0xff]
        %v349 = vld [vmem:[%s236 + $0x118] sm:$0xff]
        %v350 = vld [vmem:[%s236 + $0x120] sm:$0xff]
        %v351 = vld [vmem:[%s236 + $0x128] sm:$0xff]
        %v352 = vld [vmem:[%s236 + $0x130] sm:$0xff]
        %v353 = vld [vmem:[%s236 + $0x138] sm:$0xff]
        %v354 = vld [vmem:[%s236 + $0x140] sm:$0xff]
        %v355 = vld [vmem:[%s236 + $0x148] sm:$0xff]
        %v356 = vld [vmem:[%s236 + $0x150] sm:$0xff]
        %v357 = vld [vmem:[%s236 + $0x158] sm:$0xff]
        %v358 = vld [vmem:[%s236 + $0x160] sm:$0xff]
        %v359 = vld [vmem:[%s236 + $0x168] sm:$0xff]
        %v360 = vld [vmem:[%s236 + $0x170] sm:$0xff]
        %v361 = vld [vmem:[%s236 + $0x178] sm:$0xff]
        %v362 = vld [vmem:[%s236 + $0x180] sm:$0xff]
        %v363 = vld [vmem:[%s236 + $0x188] sm:$0xff]
        %v364 = vld [vmem:[%s236 + $0x190] sm:$0xff]
        %v365 = vld [vmem:[%s236 + $0x198] sm:$0xff]
        %v366 = vld [vmem:[%s236 + $0x1a0] sm:$0xff]
        %v367 = vld [vmem:[%s236 + $0x1a8] sm:$0xff]
        %v368 = vld [vmem:[%s236 + $0x1b0] sm:$0xff]
        %v369 = vld [vmem:[%s236 + $0x1b8] sm:$0xff]
        %v370 = vld [vmem:[%s236 + $0x1c0] sm:$0xff]
        %v371 = vld [vmem:[%s236 + $0x1c8] sm:$0xff]
        %v372 = vld [vmem:[%s236 + $0x1d0] sm:$0xff]
        %v373 = vld [vmem:[%s236 + $0x1d8] sm:$0xff]
        %v374 = vld [vmem:[%s236 + $0x1e0] sm:$0xff]
        %v375 = vld [vmem:[%s236 + $0x1e8] sm:$0xff]
        %v376 = vld [vmem:[%s236 + $0x1f0] sm:$0xff]
        %v377 = vld [vmem:[%s236 + $0x1f8] sm:$0xff]
        %378 = vmatprep.subr.mxu0 %v315
        %379 = vmatpush1.msra.mxu0 %v314
        %380 = vmatprep.subr.mxu0 %v317
        %381 = vmatpush1.msra.mxu0 %v316
        %382 = vmatprep.subr.mxu0 %v319
        %383 = vmatpush1.msra.mxu0 %v318
        %384 = vmatprep.subr.mxu0 %v321
        %385 = vmatpush1.msra.mxu0 %v320
        %386 = vmatprep.subr.mxu0 %v323
        %387 = vmatpush1.msra.mxu0 %v322
        %388 = vmatprep.subr.mxu0 %v325
        %389 = vmatpush1.msra.mxu0 %v324
        %390 = vmatprep.subr.mxu0 %v327
        %391 = vmatpush1.msra.mxu0 %v326
        %392 = vmatprep.subr.mxu0 %v329
        %393 = vmatpush1.msra.mxu0 %v328
        %394 = vmatprep.subr.mxu0 %v331
        %395 = vmatpush1.msra.mxu0 %v330
        %396 = vmatprep.subr.mxu0 %v333
        %397 = vmatpush1.msra.mxu0 %v332
        %398 = vmatprep.subr.mxu0 %v335
        %399 = vmatpush1.msra.mxu0 %v334
        %400 = vmatprep.subr.mxu0 %v337
        %401 = vmatpush1.msra.mxu0 %v336
        %402 = vmatprep.subr.mxu0 %v339
        %403 = vmatpush1.msra.mxu0 %v338
        %404 = vmatprep.subr.mxu0 %v341
        %405 = vmatpush1.msra.mxu0 %v340
        %406 = vmatprep.subr.mxu0 %v343
        %407 = vmatpush1.msra.mxu0 %v342
        %408 = vmatprep.subr.mxu0 %v345
        %409 = vmatpush1.msra.mxu0 %v344
        %410 = vmatprep.subr.mxu0 %v347
        %411 = vmatpush1.msra.mxu0 %v346
        %412 = vmatprep.subr.mxu0 %v349
        %413 = vmatpush1.msra.mxu0 %v348
        %414 = vmatprep.subr.mxu0 %v351
        %415 = vmatpush1.msra.mxu0 %v350
        %416 = vmatprep.subr.mxu0 %v353
        %417 = vmatpush1.msra.mxu0 %v352
        %418 = vmatprep.subr.mxu0 %v355
        %419 = vmatpush1.msra.mxu0 %v354
        %420 = vmatprep.subr.mxu0 %v357
        %421 = vmatpush1.msra.mxu0 %v356
        %422 = vmatprep.subr.mxu0 %v359
        %423 = vmatpush1.msra.mxu0 %v358
        %424 = vmatprep.subr.mxu0 %v361
        %425 = vmatpush1.msra.mxu0 %v360
        %426 = vmatprep.subr.mxu0 %v363
        %427 = vmatpush1.msra.mxu0 %v362
        %428 = vmatprep.subr.mxu0 %v365
        %429 = vmatpush1.msra.mxu0 %v364
        %430 = vmatprep.subr.mxu0 %v367
        %431 = vmatpush1.msra.mxu0 %v366
        %432 = vmatprep.subr.mxu0 %v369
        %433 = vmatpush1.msra.mxu0 %v368
        %434 = vmatprep.subr.mxu0 %v371
        %435 = vmatpush1.msra.mxu0 %v370
        %436 = vmatprep.subr.mxu0 %v373
        %437 = vmatpush1.msra.mxu0 %v372
        %438 = vmatprep.subr.mxu0 %v375
        %439 = vmatpush1.msra.mxu0 %v374
        %440 = vmatprep.subr.mxu0 %v377
        %441 = vmatpush1.msra.mxu0 %v376
        %442 = vmatprep.mubr.f32.mxu0 %v299
        %443 = vmatmul.mubr.f32.gmra.mrb[0].mxu0 %v298
        %v444 = vpop.f32.mrb[0].mxu0
        %v445 = vadd.f32 0.0, %v444
        %v446 = vpop.f32.mrb[0].mxu0
        %v447 = vadd.f32 0.0, %v446
        %448 = vmatprep.mubr.f32.mxu0 %v301
        %449 = vmatmul.mubr.f32.gmra.mrb[0].mxu0 %v300
        %v450 = vpop.f32.mrb[0].mxu0
        %v451 = vadd.f32 0.0, %v450
        %v452 = vpop.f32.mrb[0].mxu0
        %v453 = vadd.f32 0.0, %v452
        %454 = vmatprep.mubr.f32.mxu0 %v303
        %455 = vmatmul.mubr.f32.gmra.mrb[0].mxu0 %v302
        %v456 = vpop.f32.mrb[0].mxu0
        %v457 = vadd.f32 0.0, %v456
        %v458 = vpop.f32.mrb[0].mxu0
        %v459 = vadd.f32 0.0, %v458
        %460 = vmatprep.mubr.f32.mxu0 %v305
        %461 = vmatmul.mubr.f32.gmra.mrb[0].mxu0 %v304
        %v462 = vpop.f32.mrb[0].mxu0
        %v463 = vadd.f32 0.0, %v462
        %v464 = vpop.f32.mrb[0].mxu0
        %v465 = vadd.f32 0.0, %v464
        %466 = vmatprep.mubr.f32.mxu0 %v307
        %467 = vmatmul.mubr.f32.gmra.mrb[0].mxu0 %v306
        %v468 = vpop.f32.mrb[0].mxu0
        %v469 = vadd.f32 0.0, %v468
        %v470 = vpop.f32.mrb[0].mxu0
        %v471 = vadd.f32 0.0, %v470
        %472 = vmatprep.mubr.f32.mxu0 %v309
        %473 = vmatmul.mubr.f32.gmra.mrb[0].mxu0 %v308
        %v474 = vpop.f32.mrb[0].mxu0
        %v475 = vadd.f32 0.0, %v474
        %v476 = vpop.f32.mrb[0].mxu0
        %v477 = vadd.f32 0.0, %v476
        %478 = vmatprep.mubr.f32.mxu0 %v311
        %479 = vmatmul.mubr.f32.gmra.mrb[0].mxu0 %v310
        %v480 = vpop.f32.mrb[0].mxu0
        %v481 = vadd.f32 0.0, %v480
        %v482 = vpop.f32.mrb[0].mxu0
        %v483 = vadd.f32 0.0, %v482
        %484 = vmatprep.mubr.f32.mxu0 %v313
        %485 = vmatmul.mubr.f32.gmra.mrb[0].mxu0 %v312
        %v486 = vpop.f32.mrb[0].mxu0
        %v487 = vadd.f32 0.0, %v486
        %v488 = vpop.f32.mrb[0].mxu0
        %v489 = vadd.f32 0.0, %v488
        %490 = vdwg.mxu0
        %v491 = vadd.f32 %v282, %v445
        %v492 = vadd.f32 %v283, %v447
        %v493 = vadd.f32 %v284, %v451
        %v494 = vadd.f32 %v285, %v453
        %v495 = vadd.f32 %v286, %v457
        %v496 = vadd.f32 %v287, %v459
        %v497 = vadd.f32 %v288, %v463
        %v498 = vadd.f32 %v289, %v465
        %v499 = vadd.f32 %v290, %v469
        %v500 = vadd.f32 %v291, %v471
        %v501 = vadd.f32 %v292, %v475
        %v502 = vadd.f32 %v293, %v477
        %v503 = vadd.f32 %v294, %v481
        %v504 = vadd.f32 %v295, %v483
        %v505 = vadd.f32 %v296, %v487
        %v506 = vadd.f32 %v297, %v489
        %507 = vst [vmem:[#allocation6] sm:$0xff] %v491
        %508 = vst [vmem:[#allocation6 + $0x8] sm:$0xff] %v492
        %509 = vst [vmem:[#allocation6 + $0x10] sm:$0xff] %v493
        %510 = vst [vmem:[#allocation6 + $0x18] sm:$0xff] %v494
        %511 = vst [vmem:[#allocation6 + $0x20] sm:$0xff] %v495
        %512 = vst [vmem:[#allocation6 + $0x28] sm:$0xff] %v496
        %513 = vst [vmem:[#allocation6 + $0x30] sm:$0xff] %v497
        %514 = vst [vmem:[#allocation6 + $0x38] sm:$0xff] %v498
        %515 = vst [vmem:[#allocation6 + $0x40] sm:$0xff] %v499
        %516 = vst [vmem:[#allocation6 + $0x48] sm:$0xff] %v500
        %517 = vst [vmem:[#allocation6 + $0x50] sm:$0xff] %v501
        %518 = vst [vmem:[#allocation6 + $0x58] sm:$0xff] %v502
        %519 = vst [vmem:[#allocation6 + $0x60] sm:$0xff] %v503
        %520 = vst [vmem:[#allocation6 + $0x68] sm:$0xff] %v504
        %521 = vst [vmem:[#allocation6 + $0x70] sm:$0xff] %v505
        %522 = vst [vmem:[#allocation6 + $0x78] sm:$0xff] %v506
        // Predicated region
        $region60: #{a_call__.1} parent=46 // pred_check
          %p523 = pneg %p112
        $region61: #{a_call__.1} parent=46 // pred_check_branch
          %525 = sbr.rel (%p523) target = $region63
        $region62: #{a_call__.1} parent=46 // pred_region
          %s526 = smul.u32 8, %s22
          %s527 = smul.u32 2, %s23
          %s529 = ssub.s32 2048, 2048
          %530 = vsyncadd [#allocation5], %s529
          %s531 = smul.addr %s526, 2
          %s532 = sadd.s32 %s527, %s531
          %s533 = smul.addr %s532, 128
          %s534 = scalar_lea.hbm %s2, %s533
          %s535 = sshll.u32 [#allocation6], 4
          %s536 = int_to_ptr.vmem [resolvable:$true] %s535
          %541 = dma.vmem_to_hbm [thread:$0]  %s536, 2048, %s534, [#allocation5], 256, 256, 16
        $region63: #{a_call__.1} parent=46 // pred_fallthru
          _
        // Predicated region
        $region64: #{a_call__.1} parent=46 // pred_check
          %p542 = pneg %p112
        $region65: #{a_call__.1} parent=46 // pred_check_branch
          %544 = sbr.rel (%p542) target = $region67
        $region66: #{a_call__.1} parent=46 // pred_region
          %545 = dma.done [#allocation5], 2048
        $region67: #{a_call__.1} parent=46 // pred_fallthru
          _
      $region47: #{a_call__.1} parent=5 // pred_fallthru
        _
      %p546 = scmp.le.s32.totalorder 2, %s12
      // Predicated region
      $region68: #{a_call__.1} parent=5 // pred_check
        %p547 = pneg %p546
      $region69: #{a_call__.1} parent=5 // pred_check_branch
        %549 = sbr.rel (%p547) target = $region71
      $region70: #{a_call__.1} parent=5 // pred_region
        %s550 = ssub.s32 %s12, 2
      $region71: #{a_call__.1} parent=5 // pred_fallthru
        _
    $region6: #{a_call__.1} parent=1 // loop_footer
      %s16 = sadd.s32 1, %s12
    $region7: #{a_call__.1} parent=1 // loop_footer_branch
      %11 = sbr.rel target = $region3
    $region8: #{a_call__.1} parent=1 // loop_exit
      _
    %551 = vsyncpa [#allocation4], 1
    %s552 = scalar_lea.sflag [#allocation4], 1
    %553 = vsyncpa %s552, 1
    %554 = vsyncpa [#allocation5], 1
    %s555 = scalar_lea.sflag [#allocation5], 1
    %556 = vsyncpa %s555, 1

</llo_original>
